<compile_context>
chip_gen: v5e
topology: v5e:2x2
jax: 0.10.0
libtpu: 0.0.40
codegen_flags: <defaults>
</compile_context>

<pallas_src>
import jax
import jax.numpy as jnp
from jax.experimental import pallas as pl
from jax.experimental.pallas import tpu as pltpu


# --------------------------------------------------------------------------- #
# Kernels
# --------------------------------------------------------------------------- #
def _masked_mxu_kernel(x_ref, m_ref, o_ref, acc_ref, cnt_ref):
    """x block (1,TS,TH); mask block (1,1,TS) lane-dense; S-contraction on the MXU."""
    s = pl.program_id(2)

    @pl.when(s == 0)
    def _init():
        acc_ref[...] = jnp.zeros_like(acc_ref)
        cnt_ref[...] = jnp.zeros_like(cnt_ref)

    x = x_ref[0]                       # (TS, TH), native dtype
    m = m_ref[0]                       # (1, TS),  native dtype
    # (1,TS)@(TS,TH) matmul with f32 accumulation; VPU/XLU stay essentially idle.
    acc_ref[...] += jnp.dot(m, x, preferred_element_type=jnp.float32)
    # Running valid-token count (exact in f32 for 0/1 masks).
    cnt_ref[...] += jnp.sum(m.astype(jnp.float32), axis=1, keepdims=True)

    @pl.when(s == pl.num_programs(2) - 1)
    def _finalize():
        # 0/0 -> NaN for fully-masked rows, matching the PyTorch reference.
        o_ref[0] = (acc_ref[...] / cnt_ref[...]).astype(o_ref.dtype)


def _masked_vpu_kernel(x_ref, m_ref, o_ref, acc_ref, cnt_ref):
    """Exact float32 path: x block (1,TS,TH); mask block (1,TS,1); VPU mul + reduce."""
    s = pl.program_id(2)

    @pl.when(s == 0)
    def _init():
        acc_ref[...] = jnp.zeros_like(acc_ref)
        cnt_ref[...] = jnp.zeros_like(cnt_ref)

    x = x_ref[...]                     # (1, TS, TH) f32
    m = m_ref[...]                     # (1, TS, 1)  f32
    acc_ref[...] += jnp.sum(x * m, axis=1)          # (1, TH)
    cnt_ref[...] += jnp.sum(m, axis=1)              # (1, 1)

    @pl.when(s == pl.num_programs(2) - 1)
    def _finalize():
        o_ref[0] = (acc_ref[...] / cnt_ref[...]).astype(o_ref.dtype)


def _make_unmasked_kernel(seq_len: int):
    """No mask stream at all: f32-accumulated sum over S, scaled by 1/S at finalize."""
    inv_s = 1.0 / float(seq_len)

    def kernel(x_ref, o_ref, acc_ref):
        s = pl.program_id(2)

        @pl.when(s == 0)
        def _init():
            acc_ref[...] = jnp.zeros_like(acc_ref)

        acc_ref[...] += jnp.sum(x_ref[...], axis=1, dtype=jnp.float32)   # (1, TH)

        @pl.when(s == pl.num_programs(2) - 1)
        def _finalize():
            o_ref[0] = (acc_ref[...] * inv_s).astype(o_ref.dtype)

    return kernel


# --------------------------------------------------------------------------- #
# Tiling helpers
# --------------------------------------------------------------------------- #
def _round_up(v: int, m: int) -> int:
    return (v + m - 1) // m * m


def _largest_tile(dim: int, unit: int, cap: int) -> int:
    """Largest multiple of `unit` that divides `dim` and is <= cap (dim % unit == 0)."""
    best = unit
    k = unit
    limit = min(dim, cap)
    while k <= limit:
        if dim % k == 0:
            best = k
        k += unit
    return best


# --------------------------------------------------------------------------- #
# Wrapper (the nn.Module forward)
# --------------------------------------------------------------------------- #
def global_avg_pooling_1d(x: jax.Array, padding_mask: jax.Array | None = None) -> jax.Array:
    """Pallas implementation of GlobalAvgPooling1D.forward.

    Args:
        x: float array of shape [B, S, H].
        padding_mask: optional [B, S]; nonzero entries mark valid tokens.

    Returns:
        [B, H] array with dtype x.dtype.  Fully-masked rows yield NaN (0/0), matching
        the PyTorch reference.
    """
    assert x.ndim == 3, "expected x of shape [B, S, H]"
    B, S, H = x.shape
    out_dtype = x.dtype
    itemsize = jnp.dtype(x.dtype).itemsize

    # ---- hardware-aware per-buffer tile budget (v5e/v6e: 128 MiB VMEM, v7x: 64 MiB) ----
    try:
        vmem_cap = int(pltpu.get_tpu_info().vmem_capacity_bytes)
    except Exception:
        vmem_cap = 64 * 1024 * 1024               # conservative (v7x-sized) fallback
    x_tile_budget = max(vmem_cap // 8, 1 << 20)   # per pipeline buffer for the x tile

    # ---- hidden (lane) tile: lane-dense multiples of 128 whenever possible ----
    if H >= 128:
        H_pad = _round_up(H, 128)
        TH = _largest_tile(H_pad, 128, 1024)
    else:
        H_pad, TH = H, H
    # v7x has two TensorCores: make sure the "parallel" grid axes have >= 2 tiles when
    # the shape allows it (harmless on single-TC v5e/v6e).
    if B * (H_pad // TH) == 1 and TH >= 256:
        TH = _largest_tile(H_pad, 128, TH // 2)

    # ---- sequence (reduction) tile, capped by the VMEM budget ----
    ts_budget = max(128, x_tile_budget // (TH * itemsize))
    if S <= min(512, ts_budget):
        S_pad, TS = S, S
    else:
        S_pad = _round_up(S, 128)
        TS = _largest_tile(S_pad, 128, min(2048, ts_budget))

    # ---- zero-pad awkward shapes (zeros never perturb masked or unmasked sums) ----
    pad_s, pad_h = S_pad - S, H_pad - H
    if pad_s or pad_h:
        x = jnp.pad(x, ((0, 0), (0, pad_s), (0, pad_h)))

    grid = (B, H_pad // TH, S_pad // TS)
    x_spec = pl.BlockSpec((1, TS, TH), lambda b, h, s: (b, s, h))
    out_spec = pl.BlockSpec((1, 1, TH), lambda b, h, s: (b, 0, h))

    if padding_mask is None:
        kernel = _make_unmasked_kernel(S)
        in_specs = [x_spec]
        operands = (x,)
        scratch = [pltpu.VMEM((1, TH), jnp.float32)]
        flops = B * S_pad * H_pad
        mask_bytes = 0
    else:
        m = padding_mask.astype(x.dtype)              # same cast as the PyTorch reference
        if pad_s:
            m = jnp.pad(m, ((0, 0), (0, pad_s)))
        if x.dtype == jnp.float32:
            # Exact f32: elementwise mask multiply + f32 reduce on the VPU.
            kernel = _masked_vpu_kernel
            m = m[:, :, None]                                       # (B, S_pad, 1)
            m_spec = pl.BlockSpec((1, TS, 1), lambda b, h, s: (b, s, 0))
        else:
            # bf16 & friends: contraction over S on the otherwise-idle MXU.
            kernel = _masked_mxu_kernel
            m = m[:, None, :]                                       # (B, 1, S_pad)
            m_spec = pl.BlockSpec((1, 1, TS), lambda b, h, s: (b, 0, s))
        in_specs = [x_spec, m_spec]
        operands = (x, m)
        scratch = [pltpu.VMEM((1, TH), jnp.float32),                # f32 accumulator
                   pltpu.VMEM((1, 1), jnp.float32)]                 # f32 token count
        flops = 2 * B * S_pad * H_pad
        mask_bytes = B * S_pad * itemsize * (H_pad // TH)

    vmem_need = (2 * TS * TH * itemsize        # double-buffered x tile
                 + 2 * TS * 128 * itemsize     # mask tile (upper bound incl. lane pad)
                 + 2 * 8 * TH * itemsize       # output tile
                 + TH * 4 + 512                # accumulators
                 + (4 << 20))                  # slack for compiler-internal scratch
    vmem_limit = int(min(3 * vmem_cap // 4, max(vmem_need, 32 << 20)))

    out = pl.pallas_call(
        kernel,
        out_shape=jax.ShapeDtypeStruct((B, 1, H_pad), out_dtype),
        grid_spec=pltpu.PrefetchScalarGridSpec(
            num_scalar_prefetch=0,
            grid=grid,
            in_specs=in_specs,
            out_specs=out_spec,
            scratch_shapes=scratch,
        ),
        compiler_params=pltpu.CompilerParams(
            dimension_semantics=("parallel", "parallel", "arbitrary"),
            vmem_limit_bytes=vmem_limit,
        ),
        cost_estimate=pl.CostEstimate(
            flops=int(flops),
            transcendentals=0,
            bytes_accessed=int(B * S_pad * H_pad * itemsize + mask_bytes
                               + B * H_pad * itemsize),
        ),
    )(*operands)

    out = out.reshape(B, H_pad)
    if pad_h:
        out = out[:, :H]
    return out


# --------------------------------------------------------------------------- #
# Self-test
# --------------------------------------------------------------------------- #
if __name__ == "__main__":
    key = jax.random.PRNGKey(0)
    k1, k2, k3 = jax.random.split(key, 3)

    # --- 1) small f32 shapes matching the module convention: [B, S, H] -------------
    B, S, H = 2, 8, 32
    x = jax.random.normal(k1, (B, S, H), dtype=jnp.float32)
    lengths = jnp.array([5, 8], dtype=jnp.int32)
    padding_mask = (jnp.arange(S)[None, :] < lengths[:, None]).astype(jnp.float32)

    out_nomask = jax.block_until_ready(global_avg_pooling_1d(x, None))
    ref_nomask = jnp.mean(x, axis=1)
    assert out_nomask.shape == (B, H)
    assert jnp.allclose(out_nomask, ref_nomask, atol=1e-5, rtol=1e-5)

    out_mask = jax.block_until_ready(global_avg_pooling_1d(x, padding_mask))
    mm = padding_mask[:, :, None]
    ref_mask = jnp.sum(x * mm, axis=1) / jnp.sum(mm, axis=1)
    assert jnp.allclose(out_mask, ref_mask, atol=1e-5, rtol=1e-5)

    # --- 2) bf16, multi S-step reduction (exercises MXU path + f32 accumulator) ----
    B2, S2, H2 = 2, 4096, 256
    x2 = jax.random.normal(k2, (B2, S2, H2), dtype=jnp.bfloat16)
    lengths2 = jnp.array([1500, 4096], dtype=jnp.int32)
    pm2 = (jnp.arange(S2)[None, :] < lengths2[:, None]).astype(jnp.float32)
    out2 = jax.block_until_ready(global_avg_pooling_1d(x2, pm2))
    m2 = pm2[:, :, None]
    ref2 = jnp.sum(x2.astype(jnp.float32) * m2, axis=1) / jnp.sum(m2, axis=1)
    assert jnp.allclose(out2.astype(jnp.float32), ref2, atol=2e-2, rtol=2e-2)

    # --- 3) awkward (non-128-divisible) dims -> exercises the zero-padding path -----
    B3, S3, H3 = 3, 200, 200
    x3 = jax.random.normal(k3, (B3, S3, H3), dtype=jnp.bfloat16)
    lengths3 = jnp.array([1, 100, 200], dtype=jnp.int32)
    pm3 = (jnp.arange(S3)[None, :] < lengths3[:, None]).astype(jnp.float32)
    out3 = jax.block_until_ready(global_avg_pooling_1d(x3, pm3))
    m3 = pm3[:, :, None]
    ref3 = jnp.sum(x3.astype(jnp.float32) * m3, axis=1) / jnp.sum(m3, axis=1)
    assert out3.shape == (B3, H3)
    assert jnp.allclose(out3.astype(jnp.float32), ref3, atol=2e-2, rtol=2e-2)

    out3u = jax.block_until_ready(global_avg_pooling_1d(x3, None))
    ref3u = jnp.mean(x3.astype(jnp.float32), axis=1)
    assert jnp.allclose(out3u.astype(jnp.float32), ref3u, atol=2e-2, rtol=2e-2)

    print("KERNEL_OK")
</pallas_src>

<mosaic_0001>
module attributes {stable_mosaic.version = 11 : i64} {
  func.func @kernel(%arg0: i32, %arg1: i32, %arg2: i32, %arg3: memref<1x8x32xf32, #tpu.memory_space<vmem>>, %arg4: memref<1x1x32xf32, #tpu.memory_space<vmem>>, %arg5: memref<1x32xf32, #tpu.memory_space<vmem>>) attributes {dimension_semantics = [#tpu.dimension_semantics<parallel>, #tpu.dimension_semantics<parallel>, #tpu.dimension_semantics<arbitrary>], iteration_bounds = array<i64: 2, 1, 1>, scalar_prefetch = 0 : i64, scratch_operands = 1 : i64, tpu.core_type = #tpu.core_type<tc>, window_params = [{transform_indices = @transform_0, window_bounds = array<i64: 1, 8, 32>}, {transform_indices = @transform_1, window_bounds = array<i64: 1, 1, 32>}]} {
    %c0_i32 = arith.constant 0 : i32
    %0 = arith.cmpi eq, %arg2, %c0_i32 : i32
    %1 = arith.extui %0 : i1 to i32
    %c0_i32_0 = arith.constant 0 : i32
    %2 = arith.cmpi ne, %1, %c0_i32_0 : i32
    scf.if %2 {
      %cst_9 = arith.constant 0.000000e+00 : f32
      %11 = vector.broadcast %cst_9 : f32 to vector<1x32xf32>
      %c0_10 = arith.constant 0 : index
      %c0_11 = arith.constant 0 : index
      %12 = vector.load %arg5[%c0_10, %c0_11] : memref<1x32xf32, #tpu.memory_space<vmem>>, vector<1x32xf32>
      tpu.vector_store %arg5[%c0_10, %c0_11], %11 {strides = array<i32>} : memref<1x32xf32, #tpu.memory_space<vmem>>, vector<1x32xf32>,
    } else {
    }
    %c0 = arith.constant 0 : index
    %c0_1 = arith.constant 0 : index
    %3 = vector.load %arg5[%c0, %c0_1] : memref<1x32xf32, #tpu.memory_space<vmem>>, vector<1x32xf32>
    %c0_2 = arith.constant 0 : index
    %c0_3 = arith.constant 0 : index
    %c0_4 = arith.constant 0 : index
    %4 = vector.load %arg3[%c0_2, %c0_3, %c0_4] : memref<1x8x32xf32, #tpu.memory_space<vmem>>, vector<1x8x32xf32>
    %cst = arith.constant dense<0.000000e+00> : vector<1x32xf32>
    %5 = vector.multi_reduction <add>, %4, %cst [1] : vector<1x8x32xf32> to vector<1x32xf32>
    %6 = arith.addf %3, %5 : vector<1x32xf32>
    %c0_5 = arith.constant 0 : index
    %c0_6 = arith.constant 0 : index
    %7 = vector.load %arg5[%c0_5, %c0_6] : memref<1x32xf32, #tpu.memory_space<vmem>>, vector<1x32xf32>
    tpu.vector_store %arg5[%c0_5, %c0_6], %6 {strides = array<i32>} : memref<1x32xf32, #tpu.memory_space<vmem>>, vector<1x32xf32>,
    %c0_i32_7 = arith.constant 0 : i32
    %8 = arith.cmpi eq, %arg2, %c0_i32_7 : i32
    %9 = arith.extui %8 : i1 to i32
    %c0_i32_8 = arith.constant 0 : i32
    %10 = arith.cmpi ne, %9, %c0_i32_8 : i32
    scf.if %10 {
      %c0_9 = arith.constant 0 : index
      %c0_10 = arith.constant 0 : index
      %11 = vector.load %arg5[%c0_9, %c0_10] : memref<1x32xf32, #tpu.memory_space<vmem>>, vector<1x32xf32>
      %cst_11 = arith.constant 1.250000e-01 : f32
      %12 = vector.broadcast %cst_11 : f32 to vector<1x32xf32>
      %13 = arith.mulf %11, %12 : vector<1x32xf32>
      %c0_12 = arith.constant 0 : index
      %c0_13 = arith.constant 0 : index
      %c0_14 = arith.constant 0 : index
      %14 = vector.load %arg4[%c0_12, %c0_13, %c0_14] : memref<1x1x32xf32, #tpu.memory_space<vmem>>, vector<1x1x32xf32>
      %15 = vector.shape_cast %14 : vector<1x1x32xf32> to vector<1x32xf32>
      %16 = vector.shape_cast %13 : vector<1x32xf32> to vector<1x1x32xf32>
      tpu.vector_store %arg4[%c0_12, %c0_13, %c0_14], %16 {strides = array<i32>} : memref<1x1x32xf32, #tpu.memory_space<vmem>>, vector<1x1x32xf32>,
    } else {
    }
    return
  }
  func.func @transform_0(%arg0: i32, %arg1: i32, %arg2: i32) -> (i32, i32, i32) {
    %c0_i32 = arith.constant 0 : i32
    return %arg0, %arg2, %arg1 : i32, i32, i32
  }
  func.func @transform_1(%arg0: i32, %arg1: i32, %arg2: i32) -> (i32, i32, i32) {
    %c0_i32 = arith.constant 0 : i32
    %c0_i32_0 = arith.constant 0 : i32
    return %arg0, %c0_i32, %arg1 : i32, i32, i32
  }
}

</mosaic_0001>

<llo_original>
// kernel: tpu_custom_call.1
$region0: #{tpu_custom_call.1}
  #allocation0 [shape = 'u32[]', space=smem, size = 0x4, offset = 0x4, fixed_abs, tag = 'smem constant byte address 0x4 - core index']
  #allocation1 [shape = 'u32[72,128]{1,0:T(1,128)}', space=vmem, size = 0x9000, scoped, tag = 'internal scratch']
  #allocation2 [shape = 'f32[1,32]{1,0:T(1,128)}', space=vmem, size = 0x200, scoped, tag = 'scratch operand']
  %s0 = inlined_call_operand.hbm [shape: f32[2,8,32], index: 0, kind: input, shape index: {}]
  %s1 = inlined_call_operand.hbm [shape: f32[2,1,32], index: 1, kind: output, shape index: {}]
  %s2 = sld [smem:[#allocation0]]
  $region49: #{tpu_custom_call.1} parent=0
    _
  %s4 = ssub.s32 1, %s2
  %s5 = scalar_select 0, %s4, %s2
  $region1: #{tpu_custom_call.1} parent=0
    #allocation3 [shape = 'u8[8192]{0}', space=vmem, size = 0x2000, scoped, tag = 'input window, operand 0']
    #allocation4 [shape = 's32[2]{0}', space=sflag, size = 0x8, scoped, tag = 'scoped memory for tpu_custom_call.1']
    #allocation5 [shape = 's32[2]{0}', space=sflag, size = 0x8, scoped, tag = 'scoped memory for tpu_custom_call.1']
    #allocation6 [shape = 'u8[1024]{0}', space=vmem, size = 0x400, scoped, tag = 'output window, operand 0']
    %6 = vsyncpa [#allocation4], 0
    %s7 = scalar_lea.sflag [#allocation4], 1
    %8 = vsyncpa %s7, 0
    %9 = vsyncpa [#allocation5], 0
    %s10 = scalar_lea.sflag [#allocation5], 1
    %11 = vsyncpa %s10, 0
    loop: start=0, step=1, limit=4
    $region2: #{tpu_custom_call.1} parent=1 // loop_pre_header
      _
    $region3: #{tpu_custom_call.1} parent=1 // loop_header
      %s13 = sphi 0, %s17
      %p14 = scmp.ge.s32.totalorder %s13, 4
      %s20 = sphi 0, %s39
      %s21 = sphi 0, %s35
      %s22 = sphi 0, %s31
      %s23 = sphi 0, %s20
      %s24 = sphi 0, %s21
      %s25 = sphi 0, %s22
      %s26 = sphi 0, %s23
      %s27 = sphi 0, %s24
      %s28 = sphi 0, %s25
      %s46 = sphi 0, %s48
      %s49 = sphi 0, %s46
      %s50 = sphi 0, %s49
      %s66 = sphi 0, %s50
      %s74 = sphi 0, %s76
      %s77 = sphi 0, %s74
      %s78 = sphi 0, %s77
      %s94 = sphi 0, %s78
    $region4: #{tpu_custom_call.1} parent=1 // loop_header_branch
      %16 = sbr.rel (%p14) target = $region8
    $region5: #{tpu_custom_call.1} parent=1 // loop_body
      %s18 = ssub.s32 %s13, 1
      %s19 = ssub.s32 %s13, 2
      %s29 = sadd.s32 1, %s22
      %p30 = scmp.ge.s32.totalorder %s29, 1
      %s31 = scalar_select %p30, 0, %s29
      %s32 = sadd.s32 1, %s21
      %s33 = scalar_select %p30, %s32, %s21
      %p34 = scmp.ge.s32.totalorder %s33, 1
      %s35 = scalar_select %p34, 0, %s33
      %s36 = sadd.s32 1, %s20
      %s37 = scalar_select %p34, %s36, %s20
      %p38 = scmp.ge.s32.totalorder %s37, 2
      %s39 = scalar_select %p38, 0, %s37
      %s40 = ssub.s32 %s20, %s39
      %s41 = ssub.s32 %s22, %s31
      %s42 = sor.u32 %s40, %s41
      %s43 = ssub.s32 %s21, %s35
      %s44 = sor.u32 %s42, %s43
      %p45 = scmp.eq.s32.totalorder %s44, 0
      %s47 = sadd.s32 %s46, 1
      %s48 = scalar_select %p45, %s46, %s47
      %p51 = pneg %p45
      %p52 = scmp.eq.s32.totalorder %s13, 1
      %p53 = por %p51, %p52
      %p54 = scmp.ne.s32.totalorder %s46, %s49
      %p55 = scmp.eq.s32.totalorder %s13, 0
      %p56 = por %p54, %p55
      %p57 = scmp.ne.s32.totalorder %s46, %s49
      %p58 = scmp.eq.s32.totalorder %s18, 1
      %p59 = por %p57, %p58
      %p60 = scmp.ne.s32.totalorder %s49, %s50
      %p61 = scmp.eq.s32.totalorder %s18, 0
      %p62 = por %p60, %p61
      %p63 = scmp.ne.s32.totalorder %s49, %s50
      %p64 = scmp.eq.s32.totalorder %s19, 1
      %p65 = por %p63, %p64
      %p67 = scmp.ne.s32.totalorder %s50, %s66
      %p68 = scmp.eq.s32.totalorder %s19, 0
      %p69 = por %p67, %p68
      %s70 = ssub.s32 %s20, %s39
      %s71 = ssub.s32 %s21, %s35
      %s72 = sor.u32 %s70, %s71
      %p73 = scmp.eq.s32.totalorder %s72, 0
      %s75 = sadd.s32 %s74, 1
      %s76 = scalar_select %p73, %s74, %s75
      %p79 = pneg %p73
      %p80 = scmp.eq.s32.totalorder %s13, 1
      %p81 = por %p79, %p80
      %p82 = scmp.ne.s32.totalorder %s74, %s77
      %p83 = scmp.eq.s32.totalorder %s13, 0
      %p84 = por %p82, %p83
      %p85 = scmp.ne.s32.totalorder %s74, %s77
      %p86 = scmp.eq.s32.totalorder %s18, 1
      %p87 = por %p85, %p86
      %p88 = scmp.ne.s32.totalorder %s77, %s78
      %p89 = scmp.eq.s32.totalorder %s18, 0
      %p90 = por %p88, %p89
      %p91 = scmp.ne.s32.totalorder %s77, %s78
      %p92 = scmp.eq.s32.totalorder %s19, 1
      %p93 = por %p91, %p92
      %p95 = scmp.ne.s32.totalorder %s78, %s94
      %p96 = scmp.eq.s32.totalorder %s19, 0
      %p97 = por %p95, %p96
      %p98 = scmp.le.s32.totalorder 1, %s13
      %p99 = scmp.lt.s32.totalorder %s13, 3
      %p100 = pnand %p98, %p99
      %p101 = pneg %p100
      // Predicated region
      $region9: #{tpu_custom_call.1} parent=5 // pred_check
        _
      $region10: #{tpu_custom_call.1} parent=5 // pred_check_branch
        %103 = sbr.rel (%p100) target = $region12
      $region11: #{tpu_custom_call.1} parent=5 // pred_region
        %s104 = ssub.s32 %s13, 1
      $region12: #{tpu_custom_call.1} parent=5 // pred_fallthru
        _
      %p105 = scmp.lt.s32.totalorder %s13, 2
      // Predicated region
      $region13: #{tpu_custom_call.1} parent=5 // pred_check
        %p106 = pneg %p105
      $region14: #{tpu_custom_call.1} parent=5 // pred_check_branch
        %108 = sbr.rel (%p106) target = $region16
      $region15: #{tpu_custom_call.1} parent=5 // pred_region
        // Predicated region
        $region17: #{tpu_custom_call.1} parent=15 // pred_check
          %p109 = pneg %p56
        $region18: #{tpu_custom_call.1} parent=15 // pred_check_branch
          %111 = sbr.rel (%p109) target = $region20
        $region19: #{tpu_custom_call.1} parent=15 // pred_region
          %s112 = sand.u32 %s46, 1
          %s113 = scalar_lea.sflag [#allocation4], %s112
          %s114 = sand.u32 %s46, 1
          %s115 = smul.addr %s114, 8
          %s116 = scalar_lea.vmem [#allocation3], %s115
          %118 = vsyncadd %s113, 0
          %s119 = sadd.s32 %s21, %s22
          %s120 = sadd.s32 %s119, %s20
          %s121 = smul.addr %s120, 8
          %s122 = scalar_lea.hbm %s0, %s121
          %s124 = sshll.u32 %s122, 4
          %s125 = int_to_ptr.hbm [resolvable:$true] %s124
          %s126 = sshll.u32 %s116, 4
          %s127 = int_to_ptr.vmem [resolvable:$true] %s126
          %129 = dma.hbm_to_vmem [thread:$0]  %s125, 128, %s127, %s113
        $region20: #{tpu_custom_call.1} parent=15 // pred_fallthru
          _
      $region16: #{tpu_custom_call.1} parent=5 // pred_fallthru
        _
      %p130 = scmp.le.s32.totalorder 1, %s13
      %p131 = scmp.lt.s32.totalorder %s13, 3
      %p132 = pnand %p130, %p131
      %p133 = pneg %p132
      // Predicated region
      $region21: #{tpu_custom_call.1} parent=5 // pred_check
        _
      $region22: #{tpu_custom_call.1} parent=5 // pred_check_branch
        %135 = sbr.rel (%p132) target = $region24
      $region23: #{tpu_custom_call.1} parent=5 // pred_region
        %s136 = ssub.s32 %s13, 1
        %s137 = sand.u32 %s49, 1
        %s138 = scalar_lea.sflag [#allocation4], %s137
        %s139 = sand.u32 %s49, 1
        %s140 = smul.addr %s139, 8
        %s141 = scalar_lea.vmem [#allocation3], %s140
        // Predicated region
        $region25: #{tpu_custom_call.1} parent=23 // pred_check
          %p142 = pneg %p62
        $region26: #{tpu_custom_call.1} parent=23 // pred_check_branch
          %144 = sbr.rel (%p142) target = $region28
        $region27: #{tpu_custom_call.1} parent=23 // pred_region
          %146 = dma.done %s138, 128
        $region28: #{tpu_custom_call.1} parent=23 // pred_fallthru
          _
        %s147 = sand.u32 %s49, 1
        %s148 = scalar_lea.sflag [#allocation4], %s147
        %s149 = sand.u32 %s49, 1
        %s150 = smul.addr %s149, 8
        %s151 = scalar_lea.vmem [#allocation3], %s150
        %p152 = pneg %p62
        %p153 = pneg %p59
        %p154 = pneg %p90
        %p155 = pneg %p87
        %s156 = sand.u32 %s77, 1
        %s157 = scalar_lea.sflag [#allocation5], %s156
        %s158 = sand.u32 %s77, 1
        %s159 = scalar_lea.vmem [#allocation6], %s158
        %p160 = scmp.eq.s32.totalorder %s25, 0
        // Predicated region
        $region29: #{tpu_custom_call.1} parent=23 // pred_check
          %p161 = pneg %p160
        $region30: #{tpu_custom_call.1} parent=23 // pred_check_branch
          %163 = sbr.rel (%p161) target = $region32
        $region31: #{tpu_custom_call.1} parent=23 // pred_region
          %vm164 = vcmask 253952
          %165 = vst.msk [vmem:[#allocation2] sm:$0x1] %vm164, 0.0
        $region32: #{tpu_custom_call.1} parent=23 // pred_fallthru
          _
        %v166 = vld [vmem:[#allocation2] sm:$0x1]
        %v167 = vld [vmem:[%s141] sm:$0xff]
        %vm168 = vcmask 261120
        %v169 = vsel %vm168, %v167, 0.0
        %v170 = vrot.slane %v169, 4
        %v171 = vadd.f32 %v169, %v170
        %v172 = vrot.slane %v171, 2
        %v173 = vadd.f32 %v171, %v172
        %v174 = vrot.slane %v173, 1
        %v175 = vadd.f32 %v173, %v174
        %v176 = vadd.f32 %v166, %v175
        %vm177 = vcmask 253952
        %178 = vst.msk [vmem:[#allocation2] sm:$0x1] %vm177, %v176
        // Predicated region
        $region33: #{tpu_custom_call.1} parent=23 // pred_check
          %p179 = pneg %p160
        $region34: #{tpu_custom_call.1} parent=23 // pred_check_branch
          %181 = sbr.rel (%p179) target = $region36
        $region35: #{tpu_custom_call.1} parent=23 // pred_region
          %v182 = vld [vmem:[#allocation2] sm:$0x1]
          %v183 = vmul.f32 %v182, 0.125
          %184 = vst.msk [vmem:[%s159] sm:$0x1] %vm177, %v183
        $region36: #{tpu_custom_call.1} parent=23 // pred_fallthru
          _
        %s185 = sand.u32 %s77, 1
        %s186 = scalar_lea.sflag [#allocation5], %s185
        %s187 = sand.u32 %s77, 1
        %s188 = scalar_lea.vmem [#allocation6], %s187
        // Predicated region
        $region37: #{tpu_custom_call.1} parent=23 // pred_check
          %p189 = pneg %p87
        $region38: #{tpu_custom_call.1} parent=23 // pred_check_branch
          %191 = sbr.rel (%p189) target = $region40
        $region39: #{tpu_custom_call.1} parent=23 // pred_region
          %193 = vsyncadd %s186, 0
          %s194 = sadd.s32 %s24, %s23
          %s195 = scalar_lea.hbm %s1, %s194
          %s197 = sshll.u32 %s188, 4
          %s198 = int_to_ptr.vmem [resolvable:$true] %s197
          %s199 = sshll.u32 %s195, 4
          %s200 = int_to_ptr.hbm [resolvable:$true] %s199
          %202 = dma.vmem_to_hbm [thread:$0]  %s198, 16, %s200, %s186
        $region40: #{tpu_custom_call.1} parent=23 // pred_fallthru
          _
      $region24: #{tpu_custom_call.1} parent=5 // pred_fallthru
        _
      %p203 = scmp.le.s32.totalorder 2, %s13
      // Predicated region
      $region41: #{tpu_custom_call.1} parent=5 // pred_check
        %p204 = pneg %p203
      $region42: #{tpu_custom_call.1} parent=5 // pred_check_branch
        %206 = sbr.rel (%p204) target = $region44
      $region43: #{tpu_custom_call.1} parent=5 // pred_region
        %s207 = ssub.s32 %s13, 2
        // Predicated region
        $region45: #{tpu_custom_call.1} parent=43 // pred_check
          %p208 = pneg %p93
        $region46: #{tpu_custom_call.1} parent=43 // pred_check_branch
          %210 = sbr.rel (%p208) target = $region48
        $region47: #{tpu_custom_call.1} parent=43 // pred_region
          %s211 = sand.u32 %s78, 1
          %s212 = scalar_lea.sflag [#allocation5], %s211
          %s213 = sand.u32 %s78, 1
          %s214 = scalar_lea.vmem [#allocation6], %s213
          %216 = dma.done %s212, 16
        $region48: #{tpu_custom_call.1} parent=43 // pred_fallthru
          _
      $region44: #{tpu_custom_call.1} parent=5 // pred_fallthru
        _
    $region6: #{tpu_custom_call.1} parent=1 // loop_footer
      %s17 = sadd.s32 1, %s13
    $region7: #{tpu_custom_call.1} parent=1 // loop_footer_branch
      %12 = sbr.rel target = $region3
    $region8: #{tpu_custom_call.1} parent=1 // loop_exit
      _
    %217 = vsyncpa [#allocation4], 1
    %s218 = scalar_lea.sflag [#allocation4], 1
    %219 = vsyncpa %s218, 1
    %220 = vsyncpa [#allocation5], 1
    %s221 = scalar_lea.sflag [#allocation5], 1
    %222 = vsyncpa %s221, 1

</llo_original>
